<compile_context>
chip_gen: v6e
topology: v6e:2x2x1
jax: 0.10.0
libtpu: 0.0.40
codegen_flags: <defaults>
</compile_context>

<pallas_src>
import functools

import jax
import jax.numpy as jnp
from jax.experimental import pallas as pl
from jax.experimental.pallas import tpu as pltpu

LANES = 128  # lane width of a vreg; all on-chip feature dims are padded to this


def _round_up(x, m):
    return ((x + m - 1) // m) * m


def irisnet_kernel(x_ref, wb1_ref, wb2_ref, wb3_ref, o_ref):
    """One batch tile of the full 3-layer MLP, entirely on the VPU.

    wb*_ref: (fan_in + 1, LANES) f32 — rows [0, fan_in) are weight rows
             (zero-padded past the true fan_out); row fan_in is the bias row.
    """
    x = x_ref[...]  # (TB, 4) f32

    def linear_vpu(inp, wb_ref):
        k_in = wb_ref.shape[0] - 1  # static fan_in of this layer
        # acc starts from the (broadcast) bias row; each step is one
        # lane-broadcast of a single input column times one weight row.
        acc = wb_ref[k_in:k_in + 1, :] + inp[:, 0:1] * wb_ref[0:1, :]
        for k in range(1, k_in):
            acc = acc + inp[:, k:k + 1] * wb_ref[k:k + 1, :]
        return acc  # (TB, LANES); padded lanes stay exactly 0

    h1 = jnp.maximum(linear_vpu(x, wb1_ref), 0.0)   # ReLU(fc1)
    h2 = jnp.maximum(linear_vpu(h1, wb2_ref), 0.0)  # ReLU(fc2)
    out = linear_vpu(h2, wb3_ref)                   # fc3 (logits)

    o_ref[...] = out.astype(o_ref.dtype)            # lane-dense 128-wide store


def _pack_layer(w, b, lanes=LANES):
    """Fold bias into weight: (fan_in, fan_out) + (fan_out,) -> (fan_in+1, lanes)."""
    fan_in, fan_out = w.shape
    wb = jnp.zeros((fan_in + 1, lanes), dtype=jnp.float32)
    wb = wb.at[:fan_in, :fan_out].set(w.astype(jnp.float32))
    wb = wb.at[fan_in, :fan_out].set(jnp.reshape(b, (-1,)).astype(jnp.float32))
    return wb


@functools.partial(jax.jit, static_argnames=("tb",))
def irisnet_forward(x, params, *, tb=1024):
    """x: (B, 4) f32. params: dict of w1,b1,w2,b2,w3,b3 (weights (in,out), biases (1,out))."""
    w1, b1, w2, b2, w3, b3 = (params[k] for k in ("w1", "b1", "w2", "b2", "w3", "b3"))
    B, in_size = x.shape
    out_size = w3.shape[1]

    # Batch tile: multiple of 8 sublanes, no bigger than the (rounded) batch.
    tb = min(_round_up(tb, 8), _round_up(B, 8))
    b_pad = _round_up(B, tb)
    if b_pad != B:
        x = jnp.pad(x, ((0, b_pad - B), (0, 0)))

    wb1 = _pack_layer(w1, b1)
    wb2 = _pack_layer(w2, b2)
    wb3 = _pack_layer(w3, b3)

    grid = (b_pad // tb,)

    flops = 2 * b_pad * (w1.shape[0] * w1.shape[1]
                         + w2.shape[0] * w2.shape[1]
                         + w3.shape[0] * w3.shape[1])
    bytes_accessed = (b_pad * in_size * 4            # x read
                      + b_pad * LANES * 4            # padded output write
                      + (wb1.size + wb2.size + wb3.size) * 4)

    out_padded = pl.pallas_call(
        irisnet_kernel,
        out_shape=jax.ShapeDtypeStruct((b_pad, LANES), jnp.float32),
        grid=grid,
        in_specs=[
            pl.BlockSpec((tb, in_size), lambda i: (i, 0)),       # x: tiled over batch
            pl.BlockSpec(wb1.shape, lambda i: (0, 0)),           # weights: VMEM-resident
            pl.BlockSpec(wb2.shape, lambda i: (0, 0)),
            pl.BlockSpec(wb3.shape, lambda i: (0, 0)),
        ],
        out_specs=pl.BlockSpec((tb, LANES), lambda i: (i, 0)),   # lane-dense output slab
        compiler_params=pltpu.CompilerParams(
            dimension_semantics=("parallel",)),
        cost_estimate=pl.CostEstimate(
            flops=flops, transcendentals=0, bytes_accessed=bytes_accessed),
    )(x, wb1, wb2, wb3)

    return out_padded[:B, :out_size]


def init_params(key, input_size=4, hidden1=5, hidden2=4, output_size=3):
    """Deterministic init mimicking nn.Linear's U(-1/sqrt(fan_in), 1/sqrt(fan_in))."""
    dims = [(input_size, hidden1), (hidden1, hidden2), (hidden2, output_size)]
    params = {}
    keys = jax.random.split(key, 2 * len(dims))
    for idx, (fan_in, fan_out) in enumerate(dims):
        bound = 1.0 / jnp.sqrt(jnp.float32(fan_in))
        w = jax.random.uniform(keys[2 * idx], (fan_in, fan_out),
                               minval=-bound, maxval=bound, dtype=jnp.float32)
        b = jax.random.uniform(keys[2 * idx + 1], (1, fan_out),
                               minval=-bound, maxval=bound, dtype=jnp.float32)
        params[f"w{idx + 1}"] = w
        params[f"b{idx + 1}"] = b
    return params


def reference_forward(x, params):
    h1 = jnp.maximum(x @ params["w1"] + params["b1"], 0.0)
    h2 = jnp.maximum(h1 @ params["w2"] + params["b2"], 0.0)
    return h2 @ params["w3"] + params["b3"]


if __name__ == "__main__":
    key = jax.random.PRNGKey(0)
    k_x, k_p = jax.random.split(key)

    params = init_params(k_p)

    # Small iris-style batch (primary check).
    B = 8
    x = jax.random.normal(k_x, (B, 4), dtype=jnp.float32)
    out = jax.block_until_ready(irisnet_forward(x, params))
    ref = reference_forward(x, params)
    assert out.shape == (B, 3)
    assert jnp.allclose(out, ref, atol=1e-5, rtol=1e-5)

    # Secondary check: exercise multi-tile grid + batch padding path.
    B2 = 200
    x2 = jax.random.normal(jax.random.PRNGKey(1), (B2, 4), dtype=jnp.float32)
    out2 = jax.block_until_ready(irisnet_forward(x2, params, tb=64))
    ref2 = reference_forward(x2, params)
    assert out2.shape == (B2, 3)
    assert jnp.allclose(out2, ref2, atol=1e-5, rtol=1e-5)

    print("KERNEL_OK")
</pallas_src>

<mosaic_0001>
module attributes {stable_mosaic.version = 11 : i64} {
  func.func @irisnet_kernel(%arg0: i32, %arg1: memref<8x4xf32, #tpu.memory_space<vmem>>, %arg2: memref<5x128xf32, #tpu.memory_space<vmem>>, %arg3: memref<6x128xf32, #tpu.memory_space<vmem>>, %arg4: memref<5x128xf32, #tpu.memory_space<vmem>>, %arg5: memref<8x128xf32, #tpu.memory_space<vmem>>) attributes {dimension_semantics = [#tpu.dimension_semantics<parallel>], iteration_bounds = array<i64: 1>, scalar_prefetch = 0 : i64, scratch_operands = 0 : i64, tpu.core_type = #tpu.core_type<tc>, window_params = [{transform_indices = @transform_0, window_bounds = array<i64: 8, 4>}, {pipeline_mode = #tpu.pipeline_mode<synchronous>, transform_indices = @transform_1, window_bounds = array<i64: 5, 128>}, {pipeline_mode = #tpu.pipeline_mode<synchronous>, transform_indices = @transform_2, window_bounds = array<i64: 6, 128>}, {pipeline_mode = #tpu.pipeline_mode<synchronous>, transform_indices = @transform_3, window_bounds = array<i64: 5, 128>}, {transform_indices = @transform_4, window_bounds = array<i64: 8, 128>}]} {
    %c0 = arith.constant 0 : index
    %c0_0 = arith.constant 0 : index
    %0 = vector.load %arg1[%c0, %c0_0] : memref<8x4xf32, #tpu.memory_space<vmem>>, vector<8x4xf32>
    %c4 = arith.constant 4 : index
    %c0_1 = arith.constant 0 : index
    %1 = vector.load %arg2[%c4, %c0_1] : memref<5x128xf32, #tpu.memory_space<vmem>>, vector<1x128xf32>
    %2 = vector.extract_strided_slice %0 {offsets = [0, 0], sizes = [8, 1], strides = [1, 1]} : vector<8x4xf32> to vector<8x1xf32>
    %c0_2 = arith.constant 0 : index
    %c0_3 = arith.constant 0 : index
    %3 = vector.load %arg2[%c0_2, %c0_3] : memref<5x128xf32, #tpu.memory_space<vmem>>, vector<1x128xf32>
    %4 = vector.broadcast %2 : vector<8x1xf32> to vector<8x128xf32>
    %5 = vector.broadcast %3 : vector<1x128xf32> to vector<8x128xf32>
    %6 = arith.mulf %4, %5 : vector<8x128xf32>
    %7 = vector.broadcast %1 : vector<1x128xf32> to vector<8x128xf32>
    %8 = arith.addf %7, %6 : vector<8x128xf32>
    %9 = vector.extract_strided_slice %0 {offsets = [0, 1], sizes = [8, 1], strides = [1, 1]} : vector<8x4xf32> to vector<8x1xf32>
    %c1 = arith.constant 1 : index
    %c0_4 = arith.constant 0 : index
    %10 = vector.load %arg2[%c1, %c0_4] : memref<5x128xf32, #tpu.memory_space<vmem>>, vector<1x128xf32>
    %11 = vector.broadcast %9 : vector<8x1xf32> to vector<8x128xf32>
    %12 = vector.broadcast %10 : vector<1x128xf32> to vector<8x128xf32>
    %13 = arith.mulf %11, %12 : vector<8x128xf32>
    %14 = arith.addf %8, %13 : vector<8x128xf32>
    %15 = vector.extract_strided_slice %0 {offsets = [0, 2], sizes = [8, 1], strides = [1, 1]} : vector<8x4xf32> to vector<8x1xf32>
    %c2 = arith.constant 2 : index
    %c0_5 = arith.constant 0 : index
    %16 = vector.load %arg2[%c2, %c0_5] : memref<5x128xf32, #tpu.memory_space<vmem>>, vector<1x128xf32>
    %17 = vector.broadcast %15 : vector<8x1xf32> to vector<8x128xf32>
    %18 = vector.broadcast %16 : vector<1x128xf32> to vector<8x128xf32>
    %19 = arith.mulf %17, %18 : vector<8x128xf32>
    %20 = arith.addf %14, %19 : vector<8x128xf32>
    %21 = vector.extract_strided_slice %0 {offsets = [0, 3], sizes = [8, 1], strides = [1, 1]} : vector<8x4xf32> to vector<8x1xf32>
    %c3 = arith.constant 3 : index
    %c0_6 = arith.constant 0 : index
    %22 = vector.load %arg2[%c3, %c0_6] : memref<5x128xf32, #tpu.memory_space<vmem>>, vector<1x128xf32>
    %23 = vector.broadcast %21 : vector<8x1xf32> to vector<8x128xf32>
    %24 = vector.broadcast %22 : vector<1x128xf32> to vector<8x128xf32>
    %25 = arith.mulf %23, %24 : vector<8x128xf32>
    %26 = arith.addf %20, %25 : vector<8x128xf32>
    %cst = arith.constant 0.000000e+00 : f32
    %27 = vector.broadcast %cst : f32 to vector<8x128xf32>
    %28 = arith.maximumf %26, %27 : vector<8x128xf32>
    %c5 = arith.constant 5 : index
    %c0_7 = arith.constant 0 : index
    %29 = vector.load %arg3[%c5, %c0_7] : memref<6x128xf32, #tpu.memory_space<vmem>>, vector<1x128xf32>
    %30 = vector.extract_strided_slice %28 {offsets = [0, 0], sizes = [8, 1], strides = [1, 1]} : vector<8x128xf32> to vector<8x1xf32>
    %c0_8 = arith.constant 0 : index
    %c0_9 = arith.constant 0 : index
    %31 = vector.load %arg3[%c0_8, %c0_9] : memref<6x128xf32, #tpu.memory_space<vmem>>, vector<1x128xf32>
    %32 = vector.broadcast %30 : vector<8x1xf32> to vector<8x128xf32>
    %33 = vector.broadcast %31 : vector<1x128xf32> to vector<8x128xf32>
    %34 = arith.mulf %32, %33 : vector<8x128xf32>
    %35 = vector.broadcast %29 : vector<1x128xf32> to vector<8x128xf32>
    %36 = arith.addf %35, %34 : vector<8x128xf32>
    %37 = vector.extract_strided_slice %28 {offsets = [0, 1], sizes = [8, 1], strides = [1, 1]} : vector<8x128xf32> to vector<8x1xf32>
    %c1_10 = arith.constant 1 : index
    %c0_11 = arith.constant 0 : index
    %38 = vector.load %arg3[%c1_10, %c0_11] : memref<6x128xf32, #tpu.memory_space<vmem>>, vector<1x128xf32>
    %39 = vector.broadcast %37 : vector<8x1xf32> to vector<8x128xf32>
    %40 = vector.broadcast %38 : vector<1x128xf32> to vector<8x128xf32>
    %41 = arith.mulf %39, %40 : vector<8x128xf32>
    %42 = arith.addf %36, %41 : vector<8x128xf32>
    %43 = vector.extract_strided_slice %28 {offsets = [0, 2], sizes = [8, 1], strides = [1, 1]} : vector<8x128xf32> to vector<8x1xf32>
    %c2_12 = arith.constant 2 : index
    %c0_13 = arith.constant 0 : index
    %44 = vector.load %arg3[%c2_12, %c0_13] : memref<6x128xf32, #tpu.memory_space<vmem>>, vector<1x128xf32>
    %45 = vector.broadcast %43 : vector<8x1xf32> to vector<8x128xf32>
    %46 = vector.broadcast %44 : vector<1x128xf32> to vector<8x128xf32>
    %47 = arith.mulf %45, %46 : vector<8x128xf32>
    %48 = arith.addf %42, %47 : vector<8x128xf32>
    %49 = vector.extract_strided_slice %28 {offsets = [0, 3], sizes = [8, 1], strides = [1, 1]} : vector<8x128xf32> to vector<8x1xf32>
    %c3_14 = arith.constant 3 : index
    %c0_15 = arith.constant 0 : index
    %50 = vector.load %arg3[%c3_14, %c0_15] : memref<6x128xf32, #tpu.memory_space<vmem>>, vector<1x128xf32>
    %51 = vector.broadcast %49 : vector<8x1xf32> to vector<8x128xf32>
    %52 = vector.broadcast %50 : vector<1x128xf32> to vector<8x128xf32>
    %53 = arith.mulf %51, %52 : vector<8x128xf32>
    %54 = arith.addf %48, %53 : vector<8x128xf32>
    %55 = vector.extract_strided_slice %28 {offsets = [0, 4], sizes = [8, 1], strides = [1, 1]} : vector<8x128xf32> to vector<8x1xf32>
    %c4_16 = arith.constant 4 : index
    %c0_17 = arith.constant 0 : index
    %56 = vector.load %arg3[%c4_16, %c0_17] : memref<6x128xf32, #tpu.memory_space<vmem>>, vector<1x128xf32>
    %57 = vector.broadcast %55 : vector<8x1xf32> to vector<8x128xf32>
    %58 = vector.broadcast %56 : vector<1x128xf32> to vector<8x128xf32>
    %59 = arith.mulf %57, %58 : vector<8x128xf32>
    %60 = arith.addf %54, %59 : vector<8x128xf32>
    %cst_18 = arith.constant 0.000000e+00 : f32
    %61 = vector.broadcast %cst_18 : f32 to vector<8x128xf32>
    %62 = arith.maximumf %60, %61 : vector<8x128xf32>
    %c4_19 = arith.constant 4 : index
    %c0_20 = arith.constant 0 : index
    %63 = vector.load %arg4[%c4_19, %c0_20] : memref<5x128xf32, #tpu.memory_space<vmem>>, vector<1x128xf32>
    %64 = vector.extract_strided_slice %62 {offsets = [0, 0], sizes = [8, 1], strides = [1, 1]} : vector<8x128xf32> to vector<8x1xf32>
    %c0_21 = arith.constant 0 : index
    %c0_22 = arith.constant 0 : index
    %65 = vector.load %arg4[%c0_21, %c0_22] : memref<5x128xf32, #tpu.memory_space<vmem>>, vector<1x128xf32>
    %66 = vector.broadcast %64 : vector<8x1xf32> to vector<8x128xf32>
    %67 = vector.broadcast %65 : vector<1x128xf32> to vector<8x128xf32>
    %68 = arith.mulf %66, %67 : vector<8x128xf32>
    %69 = vector.broadcast %63 : vector<1x128xf32> to vector<8x128xf32>
    %70 = arith.addf %69, %68 : vector<8x128xf32>
    %71 = vector.extract_strided_slice %62 {offsets = [0, 1], sizes = [8, 1], strides = [1, 1]} : vector<8x128xf32> to vector<8x1xf32>
    %c1_23 = arith.constant 1 : index
    %c0_24 = arith.constant 0 : index
    %72 = vector.load %arg4[%c1_23, %c0_24] : memref<5x128xf32, #tpu.memory_space<vmem>>, vector<1x128xf32>
    %73 = vector.broadcast %71 : vector<8x1xf32> to vector<8x128xf32>
    %74 = vector.broadcast %72 : vector<1x128xf32> to vector<8x128xf32>
    %75 = arith.mulf %73, %74 : vector<8x128xf32>
    %76 = arith.addf %70, %75 : vector<8x128xf32>
    %77 = vector.extract_strided_slice %62 {offsets = [0, 2], sizes = [8, 1], strides = [1, 1]} : vector<8x128xf32> to vector<8x1xf32>
    %c2_25 = arith.constant 2 : index
    %c0_26 = arith.constant 0 : index
    %78 = vector.load %arg4[%c2_25, %c0_26] : memref<5x128xf32, #tpu.memory_space<vmem>>, vector<1x128xf32>
    %79 = vector.broadcast %77 : vector<8x1xf32> to vector<8x128xf32>
    %80 = vector.broadcast %78 : vector<1x128xf32> to vector<8x128xf32>
    %81 = arith.mulf %79, %80 : vector<8x128xf32>
    %82 = arith.addf %76, %81 : vector<8x128xf32>
    %83 = vector.extract_strided_slice %62 {offsets = [0, 3], sizes = [8, 1], strides = [1, 1]} : vector<8x128xf32> to vector<8x1xf32>
    %c3_27 = arith.constant 3 : index
    %c0_28 = arith.constant 0 : index
    %84 = vector.load %arg4[%c3_27, %c0_28] : memref<5x128xf32, #tpu.memory_space<vmem>>, vector<1x128xf32>
    %85 = vector.broadcast %83 : vector<8x1xf32> to vector<8x128xf32>
    %86 = vector.broadcast %84 : vector<1x128xf32> to vector<8x128xf32>
    %87 = arith.mulf %85, %86 : vector<8x128xf32>
    %88 = arith.addf %82, %87 : vector<8x128xf32>
    %c0_29 = arith.constant 0 : index
    %c0_30 = arith.constant 0 : index
    %89 = vector.load %arg5[%c0_29, %c0_30] : memref<8x128xf32, #tpu.memory_space<vmem>>, vector<8x128xf32>
    tpu.vector_store %arg5[%c0_29, %c0_30], %88 {strides = array<i32>} : memref<8x128xf32, #tpu.memory_space<vmem>>, vector<8x128xf32>,
    return
  }
  func.func @transform_0(%arg0: i32) -> (i32, i32) {
    %c0_i32 = arith.constant 0 : i32
    %c0_i32_0 = arith.constant 0 : i32
    return %arg0, %c0_i32 : i32, i32
  }
  func.func @transform_1(%arg0: i32) -> (i32, i32) {
    %c0_i32 = arith.constant 0 : i32
    %c0_i32_0 = arith.constant 0 : i32
    %c0_i32_1 = arith.constant 0 : i32
    return %c0_i32, %c0_i32_0 : i32, i32
  }
  func.func @transform_2(%arg0: i32) -> (i32, i32) {
    %c0_i32 = arith.constant 0 : i32
    %c0_i32_0 = arith.constant 0 : i32
    %c0_i32_1 = arith.constant 0 : i32
    return %c0_i32, %c0_i32_0 : i32, i32
  }
  func.func @transform_3(%arg0: i32) -> (i32, i32) {
    %c0_i32 = arith.constant 0 : i32
    %c0_i32_0 = arith.constant 0 : i32
    %c0_i32_1 = arith.constant 0 : i32
    return %c0_i32, %c0_i32_0 : i32, i32
  }
  func.func @transform_4(%arg0: i32) -> (i32, i32) {
    %c0_i32 = arith.constant 0 : i32
    %c0_i32_0 = arith.constant 0 : i32
    return %arg0, %c0_i32 : i32, i32
  }
}

</mosaic_0001>

<llo_original>
// kernel: irisnet_forward.1
$region0: #{irisnet_forward.1}
  #allocation0 [shape = 'u32[]', space=smem, size = 0x4, offset = 0x4, fixed_abs, tag = 'smem constant byte address 0x4 - core index']
  #allocation1 [shape = 'u32[144,128]{1,0:T(1,128)}', space=vmem, size = 0x12000, scoped, tag = 'internal scratch']
  %s0 = inlined_call_operand.vmem [shape: f32[8,4], index: 0, kind: input, shape index: {}]
  %s1 = inlined_call_operand.vmem [shape: f32[5,128], index: 1, kind: input, shape index: {}]
  %s2 = inlined_call_operand.vmem [shape: f32[6,128], index: 2, kind: input, shape index: {}]
  %s3 = inlined_call_operand.vmem [shape: f32[5,128], index: 3, kind: input, shape index: {}]
  %s4 = inlined_call_operand.vmem [shape: f32[8,128], index: 4, kind: output, shape index: {}]
  %s5 = sld [smem:[#allocation0]]
  $region26: #{irisnet_forward.1} parent=0
    _
  %s7 = ssub.s32 1, %s5
  %s8 = scalar_select 0, %s7, %s5
  // Predicated region
  $region2: #{irisnet_forward.1} parent=0 // pred_check
    _
  $region3: #{irisnet_forward.1} parent=0 // pred_check_branch
    %10 = sbr.rel (0) target = $region5
  $region4: #{irisnet_forward.1} parent=0 // pred_region
    _
  $region5: #{irisnet_forward.1} parent=0 // pred_fallthru
    _
  // Predicated region
  $region6: #{irisnet_forward.1} parent=0 // pred_check
    _
  $region7: #{irisnet_forward.1} parent=0 // pred_check_branch
    %12 = sbr.rel (0) target = $region9
  $region8: #{irisnet_forward.1} parent=0 // pred_region
    _
  $region9: #{irisnet_forward.1} parent=0 // pred_fallthru
    _
  // Predicated region
  $region10: #{irisnet_forward.1} parent=0 // pred_check
    _
  $region11: #{irisnet_forward.1} parent=0 // pred_check_branch
    %14 = sbr.rel (0) target = $region13
  $region12: #{irisnet_forward.1} parent=0 // pred_region
    _
  $region13: #{irisnet_forward.1} parent=0 // pred_fallthru
    _
  // Predicated region
  $region14: #{irisnet_forward.1} parent=0 // pred_check
    _
  $region15: #{irisnet_forward.1} parent=0 // pred_check_branch
    %16 = sbr.rel (0) target = $region17
  $region16: #{irisnet_forward.1} parent=0 // pred_region
    _
  $region17: #{irisnet_forward.1} parent=0 // pred_fallthru
    _
  %v17 = vld [vmem:[%s0] sm:$0xff]
  %v18 = vld [vmem:[%s1 + $0x4] sm:$0x1]
  %v19 = vld [vmem:[%s1] sm:$0x1]
  %21 = vset.pattern.permute.xlu0 0
  %22 = vperm.xlu0 %21, %v17
  %v23 = vpop.permute.xlu0 %22
  %v25 = vlaneseq
  %v26 = vshrl.u32 %v25, 7
  %v27 = vsub.s32 0, %v26
  %v28 = vrot.slane %v19, %v27
  %v29 = vmul.f32 %v23, %v28
  %v30 = vlaneseq
  %v31 = vshrl.u32 %v30, 7
  %v32 = vsub.s32 0, %v31
  %v33 = vrot.slane %v18, %v32
  %v34 = vadd.f32 %v33, %v29
  %v35 = vld [vmem:[%s1 + $0x1] sm:$0x1]
  %36 = vset.pattern.permute.xlu0 1
  %37 = vperm.xlu0 %36, %v17
  %v38 = vpop.permute.xlu0 %37
  %v40 = vlaneseq
  %v41 = vshrl.u32 %v40, 7
  %v42 = vsub.s32 0, %v41
  %v43 = vrot.slane %v35, %v42
  %v44 = vmul.f32 %v38, %v43
  %v45 = vadd.f32 %v34, %v44
  %v46 = vld [vmem:[%s1 + $0x2] sm:$0x1]
  %47 = vset.pattern.permute.xlu0 2
  %48 = vperm.xlu0 %47, %v17
  %v49 = vpop.permute.xlu0 %48
  %v51 = vlaneseq
  %v52 = vshrl.u32 %v51, 7
  %v53 = vsub.s32 0, %v52
  %v54 = vrot.slane %v46, %v53
  %v55 = vmul.f32 %v49, %v54
  %v56 = vadd.f32 %v45, %v55
  %v57 = vld [vmem:[%s1 + $0x3] sm:$0x1]
  %58 = vset.pattern.permute.xlu0 3
  %59 = vperm.xlu0 %58, %v17
  %v60 = vpop.permute.xlu0 %59
  %v62 = vlaneseq
  %v63 = vshrl.u32 %v62, 7
  %v64 = vsub.s32 0, %v63
  %v65 = vrot.slane %v57, %v64
  %v66 = vmul.f32 %v60, %v65
  %v67 = vadd.f32 %v56, %v66
  %v68 = vmax.f32 %v67, 0.0
  %v69 = vld [vmem:[%s2 + $0x5] sm:$0x1]
  %v70 = vld [vmem:[%s2] sm:$0x1]
  %72 = vset.pattern.permute.xlu0 0
  %73 = vperm.xlu0 %72, %v68
  %v74 = vpop.permute.xlu0 %73
  %v76 = vlaneseq
  %v77 = vshrl.u32 %v76, 7
  %v78 = vsub.s32 0, %v77
  %v79 = vrot.slane %v70, %v78
  %v80 = vmul.f32 %v74, %v79
  %v81 = vlaneseq
  %v82 = vshrl.u32 %v81, 7
  %v83 = vsub.s32 0, %v82
  %v84 = vrot.slane %v69, %v83
  %v85 = vadd.f32 %v84, %v80
  %v86 = vld [vmem:[%s2 + $0x1] sm:$0x1]
  %87 = vset.pattern.permute.xlu0 1
  %88 = vperm.xlu0 %87, %v68
  %v89 = vpop.permute.xlu0 %88
  %v91 = vlaneseq
  %v92 = vshrl.u32 %v91, 7
  %v93 = vsub.s32 0, %v92
  %v94 = vrot.slane %v86, %v93
  %v95 = vmul.f32 %v89, %v94
  %v96 = vadd.f32 %v85, %v95
  %v97 = vld [vmem:[%s2 + $0x2] sm:$0x1]
  %98 = vset.pattern.permute.xlu0 2
  %99 = vperm.xlu0 %98, %v68
  %v100 = vpop.permute.xlu0 %99
  %v102 = vlaneseq
  %v103 = vshrl.u32 %v102, 7
  %v104 = vsub.s32 0, %v103
  %v105 = vrot.slane %v97, %v104
  %v106 = vmul.f32 %v100, %v105
  %v107 = vadd.f32 %v96, %v106
  %v108 = vld [vmem:[%s2 + $0x3] sm:$0x1]
  %109 = vset.pattern.permute.xlu0 3
  %110 = vperm.xlu0 %109, %v68
  %v111 = vpop.permute.xlu0 %110
  %v113 = vlaneseq
  %v114 = vshrl.u32 %v113, 7
  %v115 = vsub.s32 0, %v114
  %v116 = vrot.slane %v108, %v115
  %v117 = vmul.f32 %v111, %v116
  %v118 = vadd.f32 %v107, %v117
  %v119 = vld [vmem:[%s2 + $0x4] sm:$0x1]
  %120 = vset.pattern.permute.xlu0 4
  %121 = vperm.xlu0 %120, %v68
  %v122 = vpop.permute.xlu0 %121
  %v124 = vlaneseq
  %v125 = vshrl.u32 %v124, 7
  %v126 = vsub.s32 0, %v125
  %v127 = vrot.slane %v119, %v126
  %v128 = vmul.f32 %v122, %v127
  %v129 = vadd.f32 %v118, %v128
  %v130 = vmax.f32 %v129, 0.0
  %v131 = vld [vmem:[%s3 + $0x4] sm:$0x1]
  %v132 = vld [vmem:[%s3] sm:$0x1]
  %134 = vset.pattern.permute.xlu0 0
  %135 = vperm.xlu0 %134, %v130
  %v136 = vpop.permute.xlu0 %135
  %v138 = vlaneseq
  %v139 = vshrl.u32 %v138, 7
  %v140 = vsub.s32 0, %v139
  %v141 = vrot.slane %v132, %v140
  %v142 = vmul.f32 %v136, %v141
  %v143 = vlaneseq
  %v144 = vshrl.u32 %v143, 7
  %v145 = vsub.s32 0, %v144
  %v146 = vrot.slane %v131, %v145
  %v147 = vadd.f32 %v146, %v142
  %v148 = vld [vmem:[%s3 + $0x1] sm:$0x1]
  %149 = vset.pattern.permute.xlu0 1
  %150 = vperm.xlu0 %149, %v130
  %v151 = vpop.permute.xlu0 %150
  %v153 = vlaneseq
  %v154 = vshrl.u32 %v153, 7
  %v155 = vsub.s32 0, %v154
  %v156 = vrot.slane %v148, %v155
  %v157 = vmul.f32 %v151, %v156
  %v158 = vadd.f32 %v147, %v157
  %v159 = vld [vmem:[%s3 + $0x2] sm:$0x1]
  %160 = vset.pattern.permute.xlu0 2
  %161 = vperm.xlu0 %160, %v130
  %v162 = vpop.permute.xlu0 %161
  %v164 = vlaneseq
  %v165 = vshrl.u32 %v164, 7
  %v166 = vsub.s32 0, %v165
  %v167 = vrot.slane %v159, %v166
  %v168 = vmul.f32 %v162, %v167
  %v169 = vadd.f32 %v158, %v168
  %v170 = vld [vmem:[%s3 + $0x3] sm:$0x1]
  %171 = vset.pattern.permute.xlu0 3
  %172 = vperm.xlu0 %171, %v130
  %v173 = vpop.permute.xlu0 %172
  %v175 = vlaneseq
  %v176 = vshrl.u32 %v175, 7
  %v177 = vsub.s32 0, %v176
  %v178 = vrot.slane %v170, %v177
  %v179 = vmul.f32 %v173, %v178
  %v180 = vadd.f32 %v169, %v179
  %181 = vst [vmem:[%s4] sm:$0xff] %v180
  // Predicated region
  $region18: #{irisnet_forward.1} parent=0 // pred_check
    _
  $region19: #{irisnet_forward.1} parent=0 // pred_check_branch
    %183 = sbr.rel (0) target = $region21
  $region20: #{irisnet_forward.1} parent=0 // pred_region
    _
  $region21: #{irisnet_forward.1} parent=0 // pred_fallthru
    _
  // Predicated region
  $region22: #{irisnet_forward.1} parent=0 // pred_check
    _
  $region23: #{irisnet_forward.1} parent=0 // pred_check_branch
    %185 = sbr.rel (0) target = $region25
  $region24: #{irisnet_forward.1} parent=0 // pred_region
    _
  $region25: #{irisnet_forward.1} parent=0 // pred_fallthru
    _

</llo_original>
